<compile_context>
chip_gen: v7x
topology: tpu7x:2x2x1
jax: 0.10.0
libtpu: 0.0.40
codegen_flags: <defaults>
</compile_context>

<pallas_src>
import functools

import jax
import jax.numpy as jnp
from jax.experimental import pallas as pl
from jax.experimental.pallas import tpu as pltpu

_LANE = 128
_SUBLANE = 8


def _regressor_kernel(x_ref, wpe_ref, bpe_ref, wh_ref, bh_ref, o_ref,
                      *, use_sigmoid: bool, inv_p: float):
    """Fused backbone-stem + regression head for one batch tile.

    x_ref  : [TB, P, Cp]  bf16  flattened image patches (Cp padded to 128k)
    wpe_ref: [Cp, F]      bf16  patch-embed ("conv") weight   (resident)
    bpe_ref: [1, F]       f32   patch-embed bias              (resident)
    wh_ref : [1, F]       f32   head weight as a row vector   (resident)
    bh_ref : [1, 1]       f32   head bias                     (SMEM scalar)
    o_ref  : [TB, 1]      f32   regression output
    """
    TB, P, Cp = x_ref.shape
    F = wpe_ref.shape[1]

    # Patch embedding == conv(kernel=stride) as a single MXU matmul.
    # P is a multiple of 8, so merging the leading dims is a pure view.
    x2d = x_ref[...].reshape(TB * P, Cp)
    feats = jnp.dot(x2d, wpe_ref[...], preferred_element_type=jnp.float32)
    feats = jnp.maximum(feats + bpe_ref[...], 0.0)          # bias + ReLU (f32)

    # Global average pool over the P patch positions -> [TB, F] features
    # (what `num_classes=0` timm models return: pooled features).
    pooled = jnp.sum(feats.reshape(TB, P, F), axis=1) * inv_p

    # Regression head Linear(F, 1): VPU multiply + lane reduce instead of an
    # N=1 MXU matmul (which would waste 255/256 of the systolic array).
    logits = jnp.sum(pooled * wh_ref[...], axis=-1, keepdims=True)
    logits = logits + bh_ref[0, 0]
    if use_sigmoid:
        logits = jax.nn.sigmoid(logits)
    o_ref[...] = logits.astype(o_ref.dtype)


def _round_up(n, m):
    return (n + m - 1) // m * m


def _pad_axis(a, axis, target):
    pad = target - a.shape[axis]
    if pad == 0:
        return a
    widths = [(0, 0)] * a.ndim
    widths[axis] = (0, pad)
    return jnp.pad(a, widths)


def _extract_patches_nchw(x, patch):
    """NCHW image -> [B, P, C*patch*patch] patches, flattened (C, kH, kW)."""
    B, C, H, W = x.shape
    hp, wp = H // patch, W // patch
    x = x.reshape(B, C, hp, patch, wp, patch)
    x = jnp.transpose(x, (0, 2, 4, 1, 3, 5))   # [B, hp, wp, C, kH, kW]
    return x.reshape(B, hp * wp, C * patch * patch)


def timm_regressor_forward(x, params, *, patch=4, is_sigmoid=True,
                           batch_tile=8):
    """x: [B, C, H, W] float32 (NCHW, PyTorch convention).  Returns [B, 1]."""
    w_pe, b_pe, w_head, b_head = (params["w_pe"], params["b_pe"],
                                  params["w_head"], params["b_head"])
    B = x.shape[0]
    Cp, F = w_pe.shape

    # Cast the big tensor to bf16 first so the NCHW->patch relayout only moves
    # half the HBM bytes; the MXU matmul accumulates in f32.
    patches = _extract_patches_nchw(x.astype(jnp.bfloat16), patch)  # [B,P,Cp]
    P = patches.shape[1]
    assert P % _SUBLANE == 0, "patch count per image must be a multiple of 8"

    # Lane-align K (Cp) and N (F) of the patch-embed matmul with zero padding
    # (exact numerical no-op).
    cp_pad = _round_up(Cp, _LANE)
    f_pad = _round_up(F, _LANE)
    patches = _pad_axis(patches, 2, cp_pad)
    w_pe_p = _pad_axis(_pad_axis(w_pe, 0, cp_pad), 1, f_pad).astype(jnp.bfloat16)
    b_pe_p = _pad_axis(b_pe.reshape(1, F), 1, f_pad).astype(jnp.float32)
    w_head_row = _pad_axis(w_head.reshape(1, F), 1, f_pad).astype(jnp.float32)
    b_head_sc = b_head.reshape(1, 1).astype(jnp.float32)

    # Batch tiling: TB a multiple of 8 so the (TB, 1) output block is
    # sublane-aligned; pad the batch with zero images (sliced off below).
    tb = _round_up(max(int(batch_tile), 1), _SUBLANE)
    b_pad = _round_up(max(B, tb), tb)
    patches = _pad_axis(patches, 0, b_pad)
    grid = (b_pad // tb,)

    # Explicit VMEM budget: double-buffered x tile + resident weights + f32
    # intermediates + headroom, capped well below v7x's 64 MiB physical VMEM.
    x_tile_bytes = tb * P * cp_pad * 2
    w_bytes = cp_pad * f_pad * 2 + 2 * f_pad * 4
    inter_bytes = tb * P * f_pad * 4 + tb * f_pad * 4
    vmem_limit = 2 * (x_tile_bytes + tb * 4) + 2 * w_bytes + inter_bytes
    vmem_limit = min(max(vmem_limit + (4 << 20), 16 << 20), 48 << 20)

    cost = pl.CostEstimate(
        flops=2 * b_pad * P * cp_pad * f_pad + 3 * b_pad * P * f_pad
              + 2 * b_pad * f_pad,
        transcendentals=b_pad if is_sigmoid else 0,
        bytes_accessed=patches.size * 2 + w_pe_p.size * 2
                       + (b_pe_p.size + w_head_row.size + 1 + b_pad) * 4,
    )

    kernel = functools.partial(_regressor_kernel,
                               use_sigmoid=is_sigmoid, inv_p=1.0 / P)

    out = pl.pallas_call(
        kernel,
        out_shape=jax.ShapeDtypeStruct((b_pad, 1), jnp.float32),
        grid_spec=pltpu.PrefetchScalarGridSpec(
            num_scalar_prefetch=0,
            grid=grid,
            in_specs=[
                pl.BlockSpec((tb, P, cp_pad), lambda i: (i, 0, 0)),
                pl.BlockSpec((cp_pad, f_pad), lambda i: (0, 0)),    # resident
                pl.BlockSpec((1, f_pad), lambda i: (0, 0)),         # resident
                pl.BlockSpec((1, f_pad), lambda i: (0, 0)),         # resident
                pl.BlockSpec(memory_space=pltpu.MemorySpace.SMEM),  # scalar
            ],
            out_specs=pl.BlockSpec((tb, 1), lambda i: (i, 0)),
        ),
        compiler_params=pltpu.CompilerParams(
            dimension_semantics=("parallel",),
            vmem_limit_bytes=int(vmem_limit)),
        cost_estimate=cost,
    )(patches, w_pe_p, b_pe_p, w_head_row, b_head_sc)
    return out[:B]


def init_params(key, in_ch, patch, feature_dim):
    """Deterministic synthetic parameters (this is not a checkpoint load)."""
    k1, k2, k3, k4 = jax.random.split(key, 4)
    cp = in_ch * patch * patch
    w_pe = jax.random.normal(k1, (cp, feature_dim), jnp.float32) * 0.05
    b_pe = jax.random.normal(k2, (1, feature_dim), jnp.float32) * 0.01
    w_head = jax.random.normal(k3, (feature_dim, 1), jnp.float32) * 0.1
    b_head = jax.random.normal(k4, (1, 1), jnp.float32) * 0.01
    return {"w_pe": w_pe, "b_pe": b_pe, "w_head": w_head, "b_head": b_head}


if __name__ == "__main__":
    # Small shapes consistent with the module; B=16 with batch_tile=8 gives a
    # 2-step "parallel" grid with resident weights.
    B, C, H, W = 16, 4, 16, 16
    PATCH = 4
    FEATURE_DIM = 32          # self.feature_dim
    IS_SIGMOID = True         # exercise the sigmoid branch

    key = jax.random.PRNGKey(0)
    kx, kp = jax.random.split(key)
    x = jax.random.normal(kx, (B, C, H, W), jnp.float32)
    params = init_params(kp, C, PATCH, FEATURE_DIM)

    out = timm_regressor_forward(x, params, patch=PATCH,
                                 is_sigmoid=IS_SIGMOID, batch_tile=8)
    out = jax.block_until_ready(out)

    # Pure-JAX reference of the same synthetic forward (same bf16 matmul path).
    patches = _extract_patches_nchw(x, PATCH)
    P = patches.shape[1]
    feats = jnp.dot(patches.reshape(-1, patches.shape[-1]).astype(jnp.bfloat16),
                    params["w_pe"].astype(jnp.bfloat16),
                    preferred_element_type=jnp.float32) + params["b_pe"]
    feats = jnp.maximum(feats, 0.0)
    pooled = feats.reshape(B, P, FEATURE_DIM).mean(axis=1)
    logits = (jnp.sum(pooled * params["w_head"][:, 0][None, :],
                      axis=-1, keepdims=True) + params["b_head"])
    ref = jax.nn.sigmoid(logits) if IS_SIGMOID else logits

    assert out.shape == (B, 1)
    assert jnp.allclose(out, ref, atol=1e-4, rtol=1e-4), (out, ref)
    print("KERNEL_OK")
</pallas_src>

<mosaic_0001>
module attributes {stable_mosaic.version = 11 : i64} {
  func.func @_regressor_kernel(%arg0: i32, %arg1: memref<8x16x128xbf16, #tpu.memory_space<vmem>>, %arg2: memref<128x128xbf16, #tpu.memory_space<vmem>>, %arg3: memref<1x128xf32, #tpu.memory_space<vmem>>, %arg4: memref<1x128xf32, #tpu.memory_space<vmem>>, %arg5: memref<1x1xf32, #tpu.memory_space<smem>>, %arg6: memref<8x1xf32, #tpu.memory_space<vmem>>) attributes {dimension_semantics = [#tpu.dimension_semantics<parallel>], iteration_bounds = array<i64: 2>, scalar_prefetch = 0 : i64, scratch_operands = 0 : i64, tpu.core_type = #tpu.core_type<tc>, window_params = [{transform_indices = @transform_0, window_bounds = array<i64: 8, 16, 128>}, {pipeline_mode = #tpu.pipeline_mode<synchronous>, transform_indices = @transform_1, window_bounds = array<i64: 128, 128>}, {pipeline_mode = #tpu.pipeline_mode<synchronous>, transform_indices = @transform_2, window_bounds = array<i64: 1, 128>}, {pipeline_mode = #tpu.pipeline_mode<synchronous>, transform_indices = @transform_3, window_bounds = array<i64: 1, 128>}, {transform_indices = @transform_4, window_bounds = array<i64: 1, 1>}, {transform_indices = @transform_5, window_bounds = array<i64: 8, 1>}]} {
    %c0 = arith.constant 0 : index
    %c0_0 = arith.constant 0 : index
    %c0_1 = arith.constant 0 : index
    %0 = vector.load %arg1[%c0, %c0_0, %c0_1] : memref<8x16x128xbf16, #tpu.memory_space<vmem>>, vector<8x16x128xbf16>
    %1 = vector.shape_cast %0 : vector<8x16x128xbf16> to vector<128x128xbf16>
    %c0_2 = arith.constant 0 : index
    %c0_3 = arith.constant 0 : index
    %2 = vector.load %arg2[%c0_2, %c0_3] : memref<128x128xbf16, #tpu.memory_space<vmem>>, vector<128x128xbf16>
    %cst = arith.constant dense<0.000000e+00> : vector<128x128xf32>
    %3 = tpu.matmul %1, %2, %cst {dimension_numbers = #tpu.dot_dimension_numbers<[1], [0], [0], [1], [0, 0, 1, 1], [], []>} : vector<128x128xbf16>, vector<128x128xbf16>, vector<128x128xf32> -> vector<128x128xf32>
    %c0_4 = arith.constant 0 : index
    %c0_5 = arith.constant 0 : index
    %4 = vector.load %arg3[%c0_4, %c0_5] : memref<1x128xf32, #tpu.memory_space<vmem>>, vector<1x128xf32>
    %5 = vector.broadcast %4 : vector<1x128xf32> to vector<128x128xf32>
    %6 = arith.addf %3, %5 : vector<128x128xf32>
    %cst_6 = arith.constant 0.000000e+00 : f32
    %7 = vector.broadcast %cst_6 : f32 to vector<128x128xf32>
    %8 = arith.maximumf %6, %7 : vector<128x128xf32>
    %9 = vector.shape_cast %8 : vector<128x128xf32> to vector<8x16x128xf32>
    %cst_7 = arith.constant dense<0.000000e+00> : vector<8x128xf32>
    %10 = vector.multi_reduction <add>, %9, %cst_7 [1] : vector<8x16x128xf32> to vector<8x128xf32>
    %cst_8 = arith.constant 6.250000e-02 : f32
    %11 = vector.broadcast %cst_8 : f32 to vector<8x128xf32>
    %12 = arith.mulf %10, %11 : vector<8x128xf32>
    %c0_9 = arith.constant 0 : index
    %c0_10 = arith.constant 0 : index
    %13 = vector.load %arg4[%c0_9, %c0_10] : memref<1x128xf32, #tpu.memory_space<vmem>>, vector<1x128xf32>
    %14 = vector.broadcast %13 : vector<1x128xf32> to vector<8x128xf32>
    %15 = arith.mulf %12, %14 : vector<8x128xf32>
    %cst_11 = arith.constant dense<0.000000e+00> : vector<8xf32>
    %16 = vector.multi_reduction <add>, %15, %cst_11 [1] : vector<8x128xf32> to vector<8xf32>
    %17 = vector.shape_cast %16 : vector<8xf32> to vector<8x1xf32>
    %c0_12 = arith.constant 0 : index
    %c0_13 = arith.constant 0 : index
    %18 = memref.load %arg5[%c0_12, %c0_13] : memref<1x1xf32, #tpu.memory_space<smem>>
    %19 = vector.broadcast %18 : f32 to vector<8x1xf32>
    %20 = arith.addf %17, %19 : vector<8x1xf32>
    %21 = arith.negf %20 : vector<8x1xf32>
    %22 = math.exp %21 : vector<8x1xf32>
    %cst_14 = arith.constant 1.000000e+00 : f32
    %23 = vector.broadcast %cst_14 : f32 to vector<8x1xf32>
    %24 = arith.addf %23, %22 : vector<8x1xf32>
    %25 = arith.divf %23, %24 : vector<8x1xf32>
    %c0_15 = arith.constant 0 : index
    %c0_16 = arith.constant 0 : index
    %26 = vector.load %arg6[%c0_15, %c0_16] : memref<8x1xf32, #tpu.memory_space<vmem>>, vector<8x1xf32>
    tpu.vector_store %arg6[%c0_15, %c0_16], %25 {strides = array<i32>} : memref<8x1xf32, #tpu.memory_space<vmem>>, vector<8x1xf32>,
    return
  }
  func.func @transform_0(%arg0: i32) -> (i32, i32, i32) {
    %c0_i32 = arith.constant 0 : i32
    %c0_i32_0 = arith.constant 0 : i32
    %c0_i32_1 = arith.constant 0 : i32
    return %arg0, %c0_i32, %c0_i32_0 : i32, i32, i32
  }
  func.func @transform_1(%arg0: i32) -> (i32, i32) {
    %c0_i32 = arith.constant 0 : i32
    %c0_i32_0 = arith.constant 0 : i32
    %c0_i32_1 = arith.constant 0 : i32
    return %c0_i32, %c0_i32_0 : i32, i32
  }
  func.func @transform_2(%arg0: i32) -> (i32, i32) {
    %c0_i32 = arith.constant 0 : i32
    %c0_i32_0 = arith.constant 0 : i32
    %c0_i32_1 = arith.constant 0 : i32
    return %c0_i32, %c0_i32_0 : i32, i32
  }
  func.func @transform_3(%arg0: i32) -> (i32, i32) {
    %c0_i32 = arith.constant 0 : i32
    %c0_i32_0 = arith.constant 0 : i32
    %c0_i32_1 = arith.constant 0 : i32
    return %c0_i32, %c0_i32_0 : i32, i32
  }
  func.func @transform_4(%arg0: i32) -> (i32, i32) {
    %c0_i32 = arith.constant 0 : i32
    %c0_i32_0 = arith.constant 0 : i32
    %c0_i32_1 = arith.constant 0 : i32
    return %c0_i32, %c0_i32_0 : i32, i32
  }
  func.func @transform_5(%arg0: i32) -> (i32, i32) {
    %c0_i32 = arith.constant 0 : i32
    %c0_i32_0 = arith.constant 0 : i32
    return %arg0, %c0_i32 : i32, i32
  }
}

</mosaic_0001>

<llo_original>
// kernel: tpu_custom_call.1
$region0: #{tpu_custom_call.1}
  #allocation0 [shape = 'u32[]', space=smem, size = 0x4, offset = 0x4, fixed_abs, tag = 'smem constant byte address 0x4 - core index']
  #allocation1 [shape = 'u32[144,128]{1,0:T(1,128)}', space=vmem, size = 0x12000, scoped, tag = 'internal scratch']
  #allocation2 [shape = 'f32[1,1]{1,0:T(1,128)S(6)}', space=smem, size = 0x200, scoped, tag = 'scoped memory for tpu_custom_call.1']
  %s0 = inlined_call_operand.hbm [shape: bf16[16,16,128], index: 0, kind: input, shape index: {}]
  %s1 = inlined_call_operand.hbm [shape: bf16[128,128], index: 1, kind: input, shape index: {}]
  %s2 = inlined_call_operand.vmem [shape: f32[1,128], index: 2, kind: input, shape index: {}]
  %s3 = inlined_call_operand.vmem [shape: f32[1,128], index: 3, kind: input, shape index: {}]
  %s4 = inlined_call_operand.<no memory space> [shape: f32[1,1], index: 4, kind: input, shape index: {}]
  %s5 = inlined_call_operand.vmem [shape: f32[16,1], index: 5, kind: output, shape index: {}]
  %s6 = sld [smem:[#allocation0]]
  $region61: #{tpu_custom_call.1} parent=0
    _
  %s8 = ssub.s32 1, %s6
  %s9 = scalar_select 0, %s8, %s6
  %10 = sst [smem:[#allocation2]] %s4
  $region1: #{tpu_custom_call.1} parent=0
    #allocation3 [shape = 'u8[65536]{0}', space=vmem, size = 0x10000, scoped, tag = 'input window, operand 0']
    #allocation4 [shape = 's32[2]{0}', space=sflag, size = 0x8, scoped, tag = 'scoped memory for tpu_custom_call.1']
    #allocation5 [shape = 'u8[32768]{0}', space=vmem, size = 0x8000, scoped, tag = 'input window, operand 1, single buffered']
    #allocation6 [shape = 's32[1]{0}', space=sflag, size = 0x4, scoped, tag = 'scoped memory for tpu_custom_call.1']
    %11 = vsyncpa [#allocation4], 0
    %s12 = scalar_lea.sflag [#allocation4], 1
    %13 = vsyncpa %s12, 0
    %14 = vsyncpa [#allocation6], 0
    loop: start=0, step=1, limit=4
    $region2: #{tpu_custom_call.1} parent=1 // loop_pre_header
      _
    $region3: #{tpu_custom_call.1} parent=1 // loop_header
      %s16 = sphi 0, %s20
      %p17 = scmp.ge.s32.totalorder %s16, 4
      %s26 = sphi 0, %s28
      %s29 = sphi 0, %s26
      %s30 = sphi 0, %s29
      %s46 = sphi 0, %s30
      %s50 = sphi 0, %s50
      %s52 = sphi 0, %s50
      %s53 = sphi 0, %s52
      %s67 = sphi 0, %s53
      %s71 = sphi 0, %s71
      %s73 = sphi 0, %s71
      %s74 = sphi 0, %s73
      %s88 = sphi 0, %s74
      %s92 = sphi 0, %s92
      %s94 = sphi 0, %s92
      %s95 = sphi 0, %s94
      %s109 = sphi 0, %s95
      %s113 = sphi 0, %s113
      %s115 = sphi 0, %s113
      %s116 = sphi 0, %s115
      %s130 = sphi 0, %s116
      %s136 = sphi 0, %s138
      %s139 = sphi 0, %s136
      %s140 = sphi 0, %s139
      %s156 = sphi 0, %s140
    $region4: #{tpu_custom_call.1} parent=1 // loop_header_branch
      %19 = sbr.rel (%p17) target = $region8
    $region5: #{tpu_custom_call.1} parent=1 // loop_body
      %s21 = ssub.s32 %s16, 1
      %s22 = ssub.s32 %s16, 2
      %s23 = sadd.s32 %s16, 1
      %s24 = ssub.s32 %s16, %s23
      %p25 = scmp.eq.s32.totalorder %s24, 0
      %s27 = sadd.s32 %s26, 1
      %s28 = scalar_select %p25, %s26, %s27
      %p31 = pneg %p25
      %p32 = scmp.eq.s32.totalorder %s16, 1
      %p33 = por %p31, %p32
      %p34 = scmp.ne.s32.totalorder %s26, %s29
      %p35 = scmp.eq.s32.totalorder %s16, 0
      %p36 = por %p34, %p35
      %p37 = scmp.ne.s32.totalorder %s26, %s29
      %p38 = scmp.eq.s32.totalorder %s21, 1
      %p39 = por %p37, %p38
      %p40 = scmp.ne.s32.totalorder %s29, %s30
      %p41 = scmp.eq.s32.totalorder %s21, 0
      %p42 = por %p40, %p41
      %p43 = scmp.ne.s32.totalorder %s29, %s30
      %p44 = scmp.eq.s32.totalorder %s22, 1
      %p45 = por %p43, %p44
      %p47 = scmp.ne.s32.totalorder %s30, %s46
      %p48 = scmp.eq.s32.totalorder %s22, 0
      %p49 = por %p47, %p48
      %s51 = sadd.s32 %s50, 1
      %p54 = scmp.eq.s32.totalorder %s16, 1
      %p55 = scmp.ne.s32.totalorder %s50, %s52
      %p56 = scmp.eq.s32.totalorder %s16, 0
      %p57 = por %p55, %p56
      %p58 = scmp.ne.s32.totalorder %s50, %s52
      %p59 = scmp.eq.s32.totalorder %s21, 1
      %p60 = por %p58, %p59
      %p61 = scmp.ne.s32.totalorder %s52, %s53
      %p62 = scmp.eq.s32.totalorder %s21, 0
      %p63 = por %p61, %p62
      %p64 = scmp.ne.s32.totalorder %s52, %s53
      %p65 = scmp.eq.s32.totalorder %s22, 1
      %p66 = por %p64, %p65
      %p68 = scmp.ne.s32.totalorder %s53, %s67
      %p69 = scmp.eq.s32.totalorder %s22, 0
      %p70 = por %p68, %p69
      %s72 = sadd.s32 %s71, 1
      %p75 = scmp.eq.s32.totalorder %s16, 1
      %p76 = scmp.ne.s32.totalorder %s71, %s73
      %p77 = scmp.eq.s32.totalorder %s16, 0
      %p78 = por %p76, %p77
      %p79 = scmp.ne.s32.totalorder %s71, %s73
      %p80 = scmp.eq.s32.totalorder %s21, 1
      %p81 = por %p79, %p80
      %p82 = scmp.ne.s32.totalorder %s73, %s74
      %p83 = scmp.eq.s32.totalorder %s21, 0
      %p84 = por %p82, %p83
      %p85 = scmp.ne.s32.totalorder %s73, %s74
      %p86 = scmp.eq.s32.totalorder %s22, 1
      %p87 = por %p85, %p86
      %p89 = scmp.ne.s32.totalorder %s74, %s88
      %p90 = scmp.eq.s32.totalorder %s22, 0
      %p91 = por %p89, %p90
      %s93 = sadd.s32 %s92, 1
      %p96 = scmp.eq.s32.totalorder %s16, 1
      %p97 = scmp.ne.s32.totalorder %s92, %s94
      %p98 = scmp.eq.s32.totalorder %s16, 0
      %p99 = por %p97, %p98
      %p100 = scmp.ne.s32.totalorder %s92, %s94
      %p101 = scmp.eq.s32.totalorder %s21, 1
      %p102 = por %p100, %p101
      %p103 = scmp.ne.s32.totalorder %s94, %s95
      %p104 = scmp.eq.s32.totalorder %s21, 0
      %p105 = por %p103, %p104
      %p106 = scmp.ne.s32.totalorder %s94, %s95
      %p107 = scmp.eq.s32.totalorder %s22, 1
      %p108 = por %p106, %p107
      %p110 = scmp.ne.s32.totalorder %s95, %s109
      %p111 = scmp.eq.s32.totalorder %s22, 0
      %p112 = por %p110, %p111
      %s114 = sadd.s32 %s113, 1
      %p117 = scmp.eq.s32.totalorder %s16, 1
      %p118 = scmp.ne.s32.totalorder %s113, %s115
      %p119 = scmp.eq.s32.totalorder %s16, 0
      %p120 = por %p118, %p119
      %p121 = scmp.ne.s32.totalorder %s113, %s115
      %p122 = scmp.eq.s32.totalorder %s21, 1
      %p123 = por %p121, %p122
      %p124 = scmp.ne.s32.totalorder %s115, %s116
      %p125 = scmp.eq.s32.totalorder %s21, 0
      %p126 = por %p124, %p125
      %p127 = scmp.ne.s32.totalorder %s115, %s116
      %p128 = scmp.eq.s32.totalorder %s22, 1
      %p129 = por %p127, %p128
      %p131 = scmp.ne.s32.totalorder %s116, %s130
      %p132 = scmp.eq.s32.totalorder %s22, 0
      %p133 = por %p131, %p132
      %s134 = ssub.s32 %s16, %s23
      %p135 = scmp.eq.s32.totalorder %s134, 0
      %s137 = sadd.s32 %s136, 1
      %s138 = scalar_select %p135, %s136, %s137
      %p141 = pneg %p135
      %p142 = scmp.eq.s32.totalorder %s16, 1
      %p143 = por %p141, %p142
      %p144 = scmp.ne.s32.totalorder %s136, %s139
      %p145 = scmp.eq.s32.totalorder %s16, 0
      %p146 = por %p144, %p145
      %p147 = scmp.ne.s32.totalorder %s136, %s139
      %p148 = scmp.eq.s32.totalorder %s21, 1
      %p149 = por %p147, %p148
      %p150 = scmp.ne.s32.totalorder %s139, %s140
      %p151 = scmp.eq.s32.totalorder %s21, 0
      %p152 = por %p150, %p151
      %p153 = scmp.ne.s32.totalorder %s139, %s140
      %p154 = scmp.eq.s32.totalorder %s22, 1
      %p155 = por %p153, %p154
      %p157 = scmp.ne.s32.totalorder %s140, %s156
      %p158 = scmp.eq.s32.totalorder %s22, 0
      %p159 = por %p157, %p158
      %p160 = scmp.le.s32.totalorder 1, %s16
      %p161 = scmp.lt.s32.totalorder %s16, 3
      %p162 = pnand %p160, %p161
      %p163 = pneg %p162
      // Predicated region
      $region9: #{tpu_custom_call.1} parent=5 // pred_check
        _
      $region10: #{tpu_custom_call.1} parent=5 // pred_check_branch
        %165 = sbr.rel (%p162) target = $region12
      $region11: #{tpu_custom_call.1} parent=5 // pred_region
        %s166 = ssub.s32 %s16, 1
        // Predicated region
        $region13: #{tpu_custom_call.1} parent=11 // pred_check
          %p167 = pneg %p63
        $region14: #{tpu_custom_call.1} parent=11 // pred_check_branch
          %169 = sbr.rel (%p167) target = $region16
        $region15: #{tpu_custom_call.1} parent=11 // pred_region
          %s171 = ssub.s32 1024, 1024
          %172 = vsyncadd [#allocation6], %s171
          %s173 = sshll.u32 [#allocation5], 4
          %s174 = int_to_ptr.vmem [resolvable:$true] %s173
          %179 = dma.hbm_to_vmem [thread:$0]  %s1, 1024, %s174, [#allocation6], 64, 64, 4
        $region16: #{tpu_custom_call.1} parent=11 // pred_fallthru
          _
        // Predicated region
        $region17: #{tpu_custom_call.1} parent=11 // pred_check
          %p180 = pneg %p84
        $region18: #{tpu_custom_call.1} parent=11 // pred_check_branch
          %182 = sbr.rel (%p180) target = $region20
        $region19: #{tpu_custom_call.1} parent=11 // pred_region
          _
        $region20: #{tpu_custom_call.1} parent=11 // pred_fallthru
          _
        // Predicated region
        $region21: #{tpu_custom_call.1} parent=11 // pred_check
          %p183 = pneg %p105
        $region22: #{tpu_custom_call.1} parent=11 // pred_check_branch
          %185 = sbr.rel (%p183) target = $region24
        $region23: #{tpu_custom_call.1} parent=11 // pred_region
          _
        $region24: #{tpu_custom_call.1} parent=11 // pred_fallthru
          _
        // Predicated region
        $region25: #{tpu_custom_call.1} parent=11 // pred_check
          %p186 = pneg %p126
        $region26: #{tpu_custom_call.1} parent=11 // pred_check_branch
          %188 = sbr.rel (%p186) target = $region28
        $region27: #{tpu_custom_call.1} parent=11 // pred_region
          _
        $region28: #{tpu_custom_call.1} parent=11 // pred_fallthru
          _
      $region12: #{tpu_custom_call.1} parent=5 // pred_fallthru
        _
      %p189 = scmp.lt.s32.totalorder %s16, 2
      // Predicated region
      $region29: #{tpu_custom_call.1} parent=5 // pred_check
        %p190 = pneg %p189
      $region30: #{tpu_custom_call.1} parent=5 // pred_check_branch
        %192 = sbr.rel (%p190) target = $region32
      $region31: #{tpu_custom_call.1} parent=5 // pred_region
        // Predicated region
        $region33: #{tpu_custom_call.1} parent=31 // pred_check
          %p193 = pneg %p36
        $region34: #{tpu_custom_call.1} parent=31 // pred_check_branch
          %195 = sbr.rel (%p193) target = $region36
        $region35: #{tpu_custom_call.1} parent=31 // pred_region
          %s196 = sand.u32 %s26, 1
          %s197 = scalar_lea.sflag [#allocation4], %s196
          %s198 = sand.u32 %s26, 1
          %s199 = smul.addr %s198, 64
          %s200 = scalar_lea.vmem [#allocation3], %s199
          %s201 = smul.u32 8, %s16
          %s203 = ssub.s32 1024, 1024
          %204 = vsyncadd %s197, %s203
          %s205 = smul.addr %s201, 2
          %s206 = smul.addr %s205, 64
          %s207 = scalar_lea.hbm %s0, %s206
          %s208 = sshll.u32 %s200, 4
          %s209 = int_to_ptr.vmem [resolvable:$true] %s208
          %214 = dma.hbm_to_vmem [thread:$0]  %s207, 1024, %s209, %s197, 64, 64, 4
        $region36: #{tpu_custom_call.1} parent=31 // pred_fallthru
          _
      $region32: #{tpu_custom_call.1} parent=5 // pred_fallthru
        _
      %p215 = scmp.le.s32.totalorder 1, %s16
      %p216 = scmp.lt.s32.totalorder %s16, 3
      %p217 = pnand %p215, %p216
      %p218 = pneg %p217
      // Predicated region
      $region37: #{tpu_custom_call.1} parent=5 // pred_check
        _
      $region38: #{tpu_custom_call.1} parent=5 // pred_check_branch
        %220 = sbr.rel (%p217) target = $region40
      $region39: #{tpu_custom_call.1} parent=5 // pred_region
        %s221 = ssub.s32 %s16, 1
        %s222 = sand.u32 %s29, 1
        %s223 = scalar_lea.sflag [#allocation4], %s222
        %s224 = sand.u32 %s29, 1
        %s225 = smul.addr %s224, 64
        %s226 = scalar_lea.vmem [#allocation3], %s225
        // Predicated region
        $region41: #{tpu_custom_call.1} parent=39 // pred_check
          %p227 = pneg %p42
        $region42: #{tpu_custom_call.1} parent=39 // pred_check_branch
          %229 = sbr.rel (%p227) target = $region44
        $region43: #{tpu_custom_call.1} parent=39 // pred_region
          %230 = dma.done %s223, 1024
        $region44: #{tpu_custom_call.1} parent=39 // pred_fallthru
          _
        // Predicated region
        $region45: #{tpu_custom_call.1} parent=39 // pred_check
          %p231 = pneg %p63
        $region46: #{tpu_custom_call.1} parent=39 // pred_check_branch
          %233 = sbr.rel (%p231) target = $region48
        $region47: #{tpu_custom_call.1} parent=39 // pred_region
          %234 = dma.done [#allocation6], 1024
        $region48: #{tpu_custom_call.1} parent=39 // pred_fallthru
          _
        %s235 = sand.u32 %s29, 1
        %s236 = scalar_lea.sflag [#allocation4], %s235
        %s237 = sand.u32 %s29, 1
        %s238 = smul.addr %s237, 64
        %s239 = scalar_lea.vmem [#allocation3], %s238
        %p240 = pneg %p42
        %p241 = pneg %p39
        %p242 = pneg %p63
        %p243 = pneg %p60
        %p244 = pneg %p84
        %p245 = pneg %p81
        %p246 = pneg %p105
        %p247 = pneg %p102
        %p248 = pneg %p126
        %p249 = pneg %p123
        %p250 = pneg %p152
        %p251 = pneg %p149
        %p252 = scmp.lt.s32.totalorder %s21, 1
        %s253 = scalar_select %p252, %s21, 1
        %s254 = smul.addr %s253, 8
        %s255 = scalar_lea.vmem %s5, %s254
        %s256 = smul.u32 8, %s21
        %p257 = scmp.lt.s32.totalorder %s21, 1
        %s258 = scalar_select %p257, %s21, 1
        %s259 = smul.addr %s258, 8
        %s260 = scalar_lea.vmem %s5, %s259
        %v262 = vld [vmem:[%s226] sm:$0xf]
        %v263 = vld [vmem:[%s226 + $0x4] sm:$0xf]
        %v264 = vld [vmem:[%s226 + $0x8] sm:$0xf]
        %v265 = vld [vmem:[%s226 + $0xc] sm:$0xf]
        %v266 = vld [vmem:[%s226 + $0x10] sm:$0xf]
        %v267 = vld [vmem:[%s226 + $0x14] sm:$0xf]
        %v268 = vld [vmem:[%s226 + $0x18] sm:$0xf]
        %v269 = vld [vmem:[%s226 + $0x1c] sm:$0xf]
        %v270 = vld [vmem:[%s226 + $0x20] sm:$0xf]
        %v271 = vld [vmem:[%s226 + $0x24] sm:$0xf]
        %v272 = vld [vmem:[%s226 + $0x28] sm:$0xf]
        %v273 = vld [vmem:[%s226 + $0x2c] sm:$0xf]
        %v274 = vld [vmem:[%s226 + $0x30] sm:$0xf]
        %v275 = vld [vmem:[%s226 + $0x34] sm:$0xf]
        %v276 = vld [vmem:[%s226 + $0x38] sm:$0xf]
        %v277 = vld [vmem:[%s226 + $0x3c] sm:$0xf]
        %v278 = vld [vmem:[#allocation5] sm:$0xf]
        %v279 = vld [vmem:[#allocation5 + $0x4] sm:$0xf]
        %v280 = vld [vmem:[#allocation5 + $0x8] sm:$0xf]
        %v281 = vld [vmem:[#allocation5 + $0xc] sm:$0xf]
        %v282 = vld [vmem:[#allocation5 + $0x10] sm:$0xf]
        %v283 = vld [vmem:[#allocation5 + $0x14] sm:$0xf]
        %v284 = vld [vmem:[#allocation5 + $0x18] sm:$0xf]
        %v285 = vld [vmem:[#allocation5 + $0x1c] sm:$0xf]
        %v286 = vld [vmem:[#allocation5 + $0x20] sm:$0xf]
        %v287 = vld [vmem:[#allocation5 + $0x24] sm:$0xf]
        %v288 = vld [vmem:[#allocation5 + $0x28] sm:$0xf]
        %v289 = vld [vmem:[#allocation5 + $0x2c] sm:$0xf]
        %v290 = vld [vmem:[#allocation5 + $0x30] sm:$0xf]
        %v291 = vld [vmem:[#allocation5 + $0x34] sm:$0xf]
        %v292 = vld [vmem:[#allocation5 + $0x38] sm:$0xf]
        %v293 = vld [vmem:[#allocation5 + $0x3c] sm:$0xf]
        %v294 = vld [vmem:[%s2] sm:$0x1]
        %v296 = vlaneseq
        %v297 = vshrl.u32 %v296, 7
        %v298 = vsub.s32 0, %v297
        %v299 = vrot.slane %v294, %v298
        %v317 = vunpack.c.l.b16 %v262
        %v318 = vunpack.c.l.b16 %v263
        %v319 = vunpack.c.l.b16 %v264
        %v320 = vunpack.c.l.b16 %v265
        %v321 = vunpack.c.l.b16 %v266
        %v322 = vunpack.c.l.b16 %v267
        %v323 = vunpack.c.l.b16 %v268
        %v324 = vunpack.c.l.b16 %v269
        %v325 = vunpack.c.l.b16 %v270
        %v326 = vunpack.c.l.b16 %v271
        %v327 = vunpack.c.l.b16 %v272
        %v328 = vunpack.c.l.b16 %v273
        %v329 = vunpack.c.l.b16 %v274
        %v330 = vunpack.c.l.b16 %v275
        %v331 = vunpack.c.l.b16 %v276
        %v332 = vunpack.c.l.b16 %v277
        %v333 = vpack.c.b16 %v318, %v317
        %v334 = vpack.c.b16 %v320, %v319
        %v335 = vpack.c.b16 %v322, %v321
        %v336 = vpack.c.b16 %v324, %v323
        %v337 = vpack.c.b16 %v326, %v325
        %v338 = vpack.c.b16 %v328, %v327
        %v339 = vpack.c.b16 %v330, %v329
        %v340 = vpack.c.b16 %v332, %v331
        %v365 = vunpack.c.l.b16 %v278
        %v366 = vunpack.c.l.b16 %v279
        %v367 = vunpack.c.l.b16 %v280
        %v368 = vunpack.c.l.b16 %v281
        %v369 = vunpack.c.l.b16 %v282
        %v370 = vunpack.c.l.b16 %v283
        %v371 = vunpack.c.l.b16 %v284
        %v372 = vunpack.c.l.b16 %v285
        %v373 = vunpack.c.l.b16 %v286
        %v374 = vunpack.c.l.b16 %v287
        %v375 = vunpack.c.l.b16 %v288
        %v376 = vunpack.c.l.b16 %v289
        %v377 = vunpack.c.l.b16 %v290
        %v378 = vunpack.c.l.b16 %v291
        %v379 = vunpack.c.l.b16 %v292
        %v380 = vunpack.c.l.b16 %v293
        %v381 = vpack.c.b16 %v366, %v365
        %v382 = vpack.c.b16 %v368, %v367
        %v383 = vpack.c.b16 %v370, %v369
        %v384 = vpack.c.b16 %v372, %v371
        %v385 = vpack.c.b16 %v374, %v373
        %v386 = vpack.c.b16 %v376, %v375
        %v387 = vpack.c.b16 %v378, %v377
        %v388 = vpack.c.b16 %v380, %v379
        %397 = vmatprep.subr.bf16.mxu0 0
        %398 = vmatpush1.bf16.msra.mxu0 %v381
        %399 = vmatprep.subr.bf16.mxu0 0
        %400 = vmatpush1.bf16.msra.mxu0 %v382
        %401 = vmatprep.subr.bf16.mxu0 0
        %402 = vmatpush1.bf16.msra.mxu0 %v383
        %403 = vmatprep.subr.bf16.mxu0 0
        %404 = vmatpush1.bf16.msra.mxu0 %v384
        %405 = vmatprep.subr.bf16.mxu0 0
        %406 = vmatpush1.bf16.msra.mxu0 %v385
        %407 = vmatprep.subr.bf16.mxu0 0
        %408 = vmatpush1.bf16.msra.mxu0 %v386
        %409 = vmatprep.subr.bf16.mxu0 0
        %410 = vmatpush1.bf16.msra.mxu0 %v387
        %411 = vmatprep.subr.bf16.mxu0 0
        %412 = vmatpush1.bf16.msra.mxu0 %v388
        %413 = vmatprep.subr.bf16.mxu0 0
        %414 = vmatpush1.bf16.msra.mxu0 0
        %415 = vmatprep.subr.bf16.mxu0 0
        %416 = vmatpush1.bf16.msra.mxu0 0
        %417 = vmatprep.subr.bf16.mxu0 0
        %418 = vmatpush1.bf16.msra.mxu0 0
        %419 = vmatprep.subr.bf16.mxu0 0
        %420 = vmatpush1.bf16.msra.mxu0 0
        %421 = vmatprep.subr.bf16.mxu0 0
        %422 = vmatpush1.bf16.msra.mxu0 0
        %423 = vmatprep.subr.bf16.mxu0 0
        %424 = vmatpush1.bf16.msra.mxu0 0
        %425 = vmatprep.subr.bf16.mxu0 0
        %426 = vmatpush1.bf16.msra.mxu0 0
        %427 = vmatprep.subr.bf16.mxu0 0
        %428 = vmatpush1.bf16.msra.mxu0 0
        %429 = vmatprep.mubr.bf16.mxu0 0
        %430 = vmatmul.mubr.bf16.gmra.mrb[0].mxu0 %v333
        %v431 = vpop.f32.mrb[0].mxu0
        %v432 = vadd.f32 %v299, %v431
        %v433 = vpop.f32.mrb[0].mxu0
        %v434 = vpop.f32.mrb[0].mxu0
        %v435 = vadd.f32 %v299, %v434
        %v436 = vpop.f32.mrb[0].mxu0
        %437 = vmatprep.mubr.bf16.mxu0 0
        %438 = vmatmul.mubr.bf16.gmra.mrb[0].mxu0 %v334
        %v439 = vpop.f32.mrb[0].mxu0
        %v440 = vadd.f32 %v299, %v439
        %v441 = vpop.f32.mrb[0].mxu0
        %v442 = vpop.f32.mrb[0].mxu0
        %v443 = vadd.f32 %v299, %v442
        %v444 = vpop.f32.mrb[0].mxu0
        %445 = vmatprep.mubr.bf16.mxu0 0
        %446 = vmatmul.mubr.bf16.gmra.mrb[0].mxu0 %v335
        %v447 = vpop.f32.mrb[0].mxu0
        %v448 = vadd.f32 %v299, %v447
        %v449 = vpop.f32.mrb[0].mxu0
        %v450 = vpop.f32.mrb[0].mxu0
        %v451 = vadd.f32 %v299, %v450
        %v452 = vpop.f32.mrb[0].mxu0
        %453 = vmatprep.mubr.bf16.mxu0 0
        %454 = vmatmul.mubr.bf16.gmra.mrb[0].mxu0 %v336
        %v455 = vpop.f32.mrb[0].mxu0
        %v456 = vadd.f32 %v299, %v455
        %v457 = vpop.f32.mrb[0].mxu0
        %v458 = vpop.f32.mrb[0].mxu0
        %v459 = vadd.f32 %v299, %v458
        %v460 = vpop.f32.mrb[0].mxu0
        %461 = vmatprep.mubr.bf16.mxu0 0
        %462 = vmatmul.mubr.bf16.gmra.mrb[0].mxu0 %v337
        %v463 = vpop.f32.mrb[0].mxu0
        %v464 = vadd.f32 %v299, %v463
        %v465 = vpop.f32.mrb[0].mxu0
        %v466 = vpop.f32.mrb[0].mxu0
        %v467 = vadd.f32 %v299, %v466
        %v468 = vpop.f32.mrb[0].mxu0
        %469 = vmatprep.mubr.bf16.mxu0 0
        %470 = vmatmul.mubr.bf16.gmra.mrb[0].mxu0 %v338
        %v471 = vpop.f32.mrb[0].mxu0
        %v472 = vadd.f32 %v299, %v471
        %v473 = vpop.f32.mrb[0].mxu0
        %v474 = vpop.f32.mrb[0].mxu0
        %v475 = vadd.f32 %v299, %v474
        %v476 = vpop.f32.mrb[0].mxu0
        %477 = vmatprep.mubr.bf16.mxu0 0
        %478 = vmatmul.mubr.bf16.gmra.mrb[0].mxu0 %v339
        %v479 = vpop.f32.mrb[0].mxu0
        %v480 = vadd.f32 %v299, %v479
        %v481 = vpop.f32.mrb[0].mxu0
        %v482 = vpop.f32.mrb[0].mxu0
        %v483 = vadd.f32 %v299, %v482
        %v484 = vpop.f32.mrb[0].mxu0
        %485 = vmatprep.mubr.bf16.mxu0 0
        %486 = vmatmul.mubr.bf16.gmra.mrb[0].mxu0 %v340
        %v487 = vpop.f32.mrb[0].mxu0
        %v488 = vadd.f32 %v299, %v487
        %v489 = vpop.f32.mrb[0].mxu0
        %v490 = vpop.f32.mrb[0].mxu0
        %v491 = vadd.f32 %v299, %v490
        %v492 = vpop.f32.mrb[0].mxu0
        %493 = vdwg.mxu0
        %v494 = vmax.f32 %v432, 0.0
        %v495 = vmax.f32 %v435, 0.0
        %v496 = vmax.f32 %v440, 0.0
        %v497 = vmax.f32 %v443, 0.0
        %v498 = vmax.f32 %v448, 0.0
        %v499 = vmax.f32 %v451, 0.0
        %v500 = vmax.f32 %v456, 0.0
        %v501 = vmax.f32 %v459, 0.0
        %v502 = vmax.f32 %v464, 0.0
        %v503 = vmax.f32 %v467, 0.0
        %v504 = vmax.f32 %v472, 0.0
        %v505 = vmax.f32 %v475, 0.0
        %v506 = vmax.f32 %v480, 0.0
        %v507 = vmax.f32 %v483, 0.0
        %v508 = vmax.f32 %v488, 0.0
        %v509 = vmax.f32 %v491, 0.0
        %v510 = vadd.f32 %v494, %v495
        %v511 = vrot.slane %v510, 4
        %v512 = vadd.f32 %v510, %v511
        %v513 = vrot.slane %v512, 2
        %v514 = vadd.f32 %v512, %v513
        %v515 = vrot.slane %v514, 1
        %v516 = vadd.f32 %v514, %v515
        %v517 = vadd.f32 %v496, %v497
        %v518 = vrot.slane %v517, 4
        %v519 = vadd.f32 %v517, %v518
        %v520 = vrot.slane %v519, 2
        %v521 = vadd.f32 %v519, %v520
        %v522 = vrot.slane %v521, 1
        %v523 = vadd.f32 %v521, %v522
        %v524 = vadd.f32 %v498, %v499
        %v525 = vrot.slane %v524, 4
        %v526 = vadd.f32 %v524, %v525
        %v527 = vrot.slane %v526, 2
        %v528 = vadd.f32 %v526, %v527
        %v529 = vrot.slane %v528, 1
        %v530 = vadd.f32 %v528, %v529
        %v531 = vadd.f32 %v500, %v501
        %v532 = vrot.slane %v531, 4
        %v533 = vadd.f32 %v531, %v532
        %v534 = vrot.slane %v533, 2
        %v535 = vadd.f32 %v533, %v534
        %v536 = vrot.slane %v535, 1
        %v537 = vadd.f32 %v535, %v536
        %v538 = vadd.f32 %v502, %v503
        %v539 = vrot.slane %v538, 4
        %v540 = vadd.f32 %v538, %v539
        %v541 = vrot.slane %v540, 2
        %v542 = vadd.f32 %v540, %v541
        %v543 = vrot.slane %v542, 1
        %v544 = vadd.f32 %v542, %v543
        %v545 = vadd.f32 %v504, %v505
        %v546 = vrot.slane %v545, 4
        %v547 = vadd.f32 %v545, %v546
        %v548 = vrot.slane %v547, 2
        %v549 = vadd.f32 %v547, %v548
        %v550 = vrot.slane %v549, 1
        %v551 = vadd.f32 %v549, %v550
        %v552 = vadd.f32 %v506, %v507
        %v553 = vrot.slane %v552, 4
        %v554 = vadd.f32 %v552, %v553
        %v555 = vrot.slane %v554, 2
        %v556 = vadd.f32 %v554, %v555
        %v557 = vrot.slane %v556, 1
        %v558 = vadd.f32 %v556, %v557
        %v559 = vadd.f32 %v508, %v509
        %v560 = vrot.slane %v559, 4
        %v561 = vadd.f32 %v559, %v560
        %v562 = vrot.slane %v561, 2
        %v563 = vadd.f32 %v561, %v562
        %v564 = vrot.slane %v563, 1
        %v565 = vadd.f32 %v563, %v564
        %v566 = vmul.f32 %v516, 0.0625
        %v567 = vmul.f32 %v523, 0.0625
        %v568 = vmul.f32 %v530, 0.0625
        %v569 = vmul.f32 %v537, 0.0625
        %v570 = vmul.f32 %v544, 0.0625
        %v571 = vmul.f32 %v551, 0.0625
        %v572 = vmul.f32 %v558, 0.0625
        %v573 = vmul.f32 %v565, 0.0625
        %v574 = vld [vmem:[%s3] sm:$0x1]
        %v576 = vlaneseq
        %v577 = vshrl.u32 %v576, 7
        %v578 = vsub.s32 0, %v577
        %v579 = vrot.slane %v574, %v578
        %v581 = vmul.f32 %v566, %v579
        %v582 = vmul.f32 %v567, %v579
        %v583 = vmul.f32 %v568, %v579
        %v584 = vmul.f32 %v569, %v579
        %v585 = vmul.f32 %v570, %v579
        %v586 = vmul.f32 %v571, %v579
        %v587 = vmul.f32 %v572, %v579
        %v588 = vmul.f32 %v573, %v579
        %v597 = vrot.slane %v582, 7
        %vm598 = vcmask 1041409
        %v599 = vsel %vm598, %v597, %v581
        %v600 = vrot.slane %v583, 6
        %vm601 = vcmask 1042434
        %v602 = vsel %vm601, %v600, %v599
        %v603 = vrot.slane %v584, 5
        %vm604 = vcmask 1043459
        %v605 = vsel %vm604, %v603, %v602
        %v606 = vrot.slane %v585, 4
        %vm607 = vcmask 1044484
        %v608 = vsel %vm607, %v606, %v605
        %v609 = vrot.slane %v586, 3
        %vm610 = vcmask 1045509
        %v611 = vsel %vm610, %v609, %v608
        %v612 = vrot.slane %v587, 2
        %vm613 = vcmask 1046534
        %v614 = vsel %vm613, %v612, %v611
        %v615 = vrot.slane %v588, 1
        %vm616 = vcmask 1047559
        %v617 = vsel %vm616, %v615, %v614
        %619 = vadd.xlane.f32.xlu0 %v617
        %v620 = vpop.xlane.xlu0 %619
        %s621 = sld [smem:[#allocation2]]
        %v622 = vstv %s621
        %v623 = vadd.f32 %v620, %v622
        %v624 = vxor.u32 %v623, 2147483648
        %v625 = vmul.f32 %v624, 1.442695
        %v626 = vpow.pop %v625
        %v627 = vadd.f32 %v626, 1.0
        %v628 = vrcp.pop %v627
        %v629 = vmul.f32 1.0, %v628
        %vm630 = vcmask 7168
        %631 = vst.msk [vmem:[%s260] sm:$0xff] %vm630, %v629
        %p632 = scmp.lt.s32.totalorder %s21, 1
        %s633 = scalar_select %p632, %s21, 1
        %s634 = smul.addr %s633, 8
        %s635 = scalar_lea.vmem %s5, %s634
        // Predicated region
        $region49: #{tpu_custom_call.1} parent=39 // pred_check
          %p636 = pneg %p149
        $region50: #{tpu_custom_call.1} parent=39 // pred_check_branch
          %638 = sbr.rel (%p636) target = $region52
        $region51: #{tpu_custom_call.1} parent=39 // pred_region
          _
        $region52: #{tpu_custom_call.1} parent=39 // pred_fallthru
          _
      $region40: #{tpu_custom_call.1} parent=5 // pred_fallthru
        _
      %p639 = scmp.le.s32.totalorder 2, %s16
      // Predicated region
      $region53: #{tpu_custom_call.1} parent=5 // pred_check
        %p640 = pneg %p639
      $region54: #{tpu_custom_call.1} parent=5 // pred_check_branch
        %642 = sbr.rel (%p640) target = $region56
      $region55: #{tpu_custom_call.1} parent=5 // pred_region
        %s643 = ssub.s32 %s16, 2
        // Predicated region
        $region57: #{tpu_custom_call.1} parent=55 // pred_check
          %p644 = pneg %p155
        $region58: #{tpu_custom_call.1} parent=55 // pred_check_branch
          %646 = sbr.rel (%p644) target = $region60
        $region59: #{tpu_custom_call.1} parent=55 // pred_region
          %p647 = scmp.lt.s32.totalorder %s22, 1
          %s648 = scalar_select %p647, %s22, 1
          %s649 = smul.addr %s648, 8
          %s650 = scalar_lea.vmem %s5, %s649
        $region60: #{tpu_custom_call.1} parent=55 // pred_fallthru
          _
      $region56: #{tpu_custom_call.1} parent=5 // pred_fallthru
        _
    $region6: #{tpu_custom_call.1} parent=1 // loop_footer
      %s20 = sadd.s32 1, %s16
    $region7: #{tpu_custom_call.1} parent=1 // loop_footer_branch
      %15 = sbr.rel target = $region3
    $region8: #{tpu_custom_call.1} parent=1 // loop_exit
      _
    %651 = vsyncpa [#allocation4], 1
    %s652 = scalar_lea.sflag [#allocation4], 1
    %653 = vsyncpa %s652, 1
    %654 = vsyncpa [#allocation6], 1

</llo_original>
